<compile_context>
chip_gen: v7x
topology: tpu7x:2x2x1
jax: 0.10.0
libtpu: 0.0.40
codegen_flags: <defaults>
</compile_context>

<pallas_src>
import jax
import jax.numpy as jnp
from jax import lax
from jax.experimental import pallas as pl
from jax.experimental.pallas import tpu as pltpu


def _coord_embed_kernel(x_ref, w_in_ref, b_in_ref, w_h_ref, b_h_ref,
                        w_out_ref, b_out_ref, o_ref):
    """Fused 3-layer MLP.

    x_ref    : (bt, in_dim)        batch-major input tile (native layout)
    w_*_ref  : (out_dim, in_dim)   PyTorch-native Linear weight layout
    b_in/b_h : (hid_dim, 1)        column bias (broadcast across lanes)
    b_out    : (1, emb_dim)        row bias for the batch-major output
    o_ref    : (bt, emb_dim)       batch-major output tile
    Intermediates are feature-major: (hid_dim, bt) with batch on the lane axis.
    """
    x = x_ref[...]

    # in_layer: h = W_in @ x^T  — contract the feature axis of both operands;
    # the transposed RHS is handled on the MXU (no HBM-side transpose of x).
    h = lax.dot_general(w_in_ref[...], x, (((1,), (1,)), ((), ())),
                        preferred_element_type=jnp.float32)
    h = jnp.maximum(h + b_in_ref[...], 0.0)                      # (hid, bt)

    # hidden_layer1: Linear + ReLU, residual add (x = layer(x) + x).
    r = jnp.dot(w_h_ref[...], h.astype(w_h_ref.dtype),
                preferred_element_type=jnp.float32)
    h = jnp.maximum(r + b_h_ref[...], 0.0) + h                   # (hid, bt)

    # out_layer: produce the batch-major output block directly. The small
    # (hid, bt) -> (bt, hid) flip runs on the otherwise-idle XLU; the matmul
    # contracts the hidden axis of both operands (transposed RHS on the MXU).
    h_t = h.astype(w_out_ref.dtype).T                            # (bt, hid)
    y = lax.dot_general(h_t, w_out_ref[...], (((1,), (1,)), ((), ())),
                        preferred_element_type=jnp.float32)
    o_ref[...] = (y + b_out_ref[...]).astype(o_ref.dtype)        # (bt, emb)


_TILE_CAP = 2048  # batch rows per grid step; VMEM-safe even on v7x's 64 MiB


def _round_up(x, m):
    return ((x + m - 1) // m) * m


def _pick_batch_tile(B):
    """Fewest grid steps possible; >= 2 (and even) when B > 128 so both of
    v7x's TensorCores get work (costs one extra ~0.35us step on 1-TC v5e/v6e)."""
    if B <= 128:
        return B                                   # single full-extent block
    steps = max(2, _round_up(pl.cdiv(B, _TILE_CAP), 2))
    return min(_TILE_CAP, _round_up(pl.cdiv(B, steps), 128))


@jax.jit
def coordinate_embedding(x, w_in, b_in, w_h, b_h, w_out, b_out):
    """x: (B, in_dim). Weights in PyTorch layout (out_dim, in_dim), biases (out_dim,).
    Returns (B, emb_dim)."""
    B, in_dim = x.shape
    hid_dim = w_in.shape[0]
    emb_dim = w_out.shape[0]

    bt = _pick_batch_tile(B)
    grid = (pl.cdiv(B, bt),)  # ragged last tile (if any) is masked by Pallas

    # Tiny bias views for in-kernel broadcasting (fused under jit; no batch-sized
    # wrapper ops remain — no x.T, no jnp.pad, no output slice/transpose).
    b_in_c = b_in.reshape(hid_dim, 1)
    b_h_c = b_h.reshape(hid_dim, 1)
    b_out_r = b_out.reshape(1, emb_dim)

    const = lambda i: (0, 0)  # weights / biases: DMA'd once, resident across the grid

    return pl.pallas_call(
        _coord_embed_kernel,
        out_shape=jax.ShapeDtypeStruct((B, emb_dim), x.dtype),
        grid_spec=pltpu.PrefetchScalarGridSpec(
            num_scalar_prefetch=0,
            grid=grid,
            in_specs=[
                pl.BlockSpec((bt, in_dim), lambda i: (i, 0)),    # x (native layout)
                pl.BlockSpec((hid_dim, in_dim), const),          # w_in
                pl.BlockSpec((hid_dim, 1), const),               # b_in
                pl.BlockSpec((hid_dim, hid_dim), const),         # w_h
                pl.BlockSpec((hid_dim, 1), const),               # b_h
                pl.BlockSpec((emb_dim, hid_dim), const),         # w_out
                pl.BlockSpec((1, emb_dim), const),               # b_out
            ],
            out_specs=pl.BlockSpec((bt, emb_dim), lambda i: (i, 0)),
        ),
        # Batch axis is embarrassingly parallel -> shards across v7x's 2 TCs.
        compiler_params=pltpu.CompilerParams(
            dimension_semantics=("parallel",)),
    )(x, w_in, b_in_c, w_h, b_h_c, w_out, b_out_r)


def _init_linear(key, in_dim, out_dim):
    # PyTorch nn.Linear default init: U(-1/sqrt(in_dim), 1/sqrt(in_dim)),
    # weight stored PyTorch-style as (out_dim, in_dim).
    kw, kb = jax.random.split(key)
    bound = 1.0 / (in_dim ** 0.5)
    w = jax.random.uniform(kw, (out_dim, in_dim), jnp.float32, -bound, bound)
    b = jax.random.uniform(kb, (out_dim,), jnp.float32, -bound, bound)
    return w, b


def _reference(x, w_in, b_in, w_h, b_h, w_out, b_out):
    h = jnp.maximum(x @ w_in.T + b_in, 0.0)
    h = jnp.maximum(h @ w_h.T + b_h, 0.0) + h
    return h @ w_out.T + b_out


if __name__ == "__main__":
    # Small, module-consistent shapes: coordinate features in, embedding out.
    # batch=256 -> 2 grid steps of 128 rows each: even step count (both v7x TCs
    # participate), no ragged tiles, and only one extra ~0.35us step on v5e/v6e.
    batch, input_dim, hidden_dim, embed_dim = 256, 8, 32, 16

    key = jax.random.PRNGKey(0)
    kx, k1, k2, k3 = jax.random.split(key, 4)

    x = jax.random.normal(kx, (batch, input_dim), jnp.float32)
    w_in, b_in = _init_linear(k1, input_dim, hidden_dim)
    w_h, b_h = _init_linear(k2, hidden_dim, hidden_dim)
    w_out, b_out = _init_linear(k3, hidden_dim, embed_dim)

    out = coordinate_embedding(x, w_in, b_in, w_h, b_h, w_out, b_out)
    out = jax.block_until_ready(out)

    ref = _reference(x, w_in, b_in, w_h, b_h, w_out, b_out)
    assert out.shape == (batch, embed_dim)
    # Tolerance covers possible bf16-input rounding on the MXU (default matmul
    # precision) in either the kernel or the XLA reference; structural errors
    # (missing bias / ReLU / residual) would be orders of magnitude larger.
    max_err = float(jnp.max(jnp.abs(out - ref)))
    assert jnp.allclose(out, ref, atol=2e-3, rtol=2e-3), max_err

    print("KERNEL_OK")
</pallas_src>

<mosaic_0001>
module attributes {stable_mosaic.version = 11 : i64} {
  func.func @_coord_embed_kernel(%arg0: i32, %arg1: memref<128x8xf32, #tpu.memory_space<vmem>>, %arg2: memref<32x8xf32, #tpu.memory_space<vmem>>, %arg3: memref<32x1xf32, #tpu.memory_space<vmem>>, %arg4: memref<32x32xf32, #tpu.memory_space<vmem>>, %arg5: memref<32x1xf32, #tpu.memory_space<vmem>>, %arg6: memref<16x32xf32, #tpu.memory_space<vmem>>, %arg7: memref<1x16xf32, #tpu.memory_space<vmem>>, %arg8: memref<128x16xf32, #tpu.memory_space<vmem>>) attributes {dimension_semantics = [#tpu.dimension_semantics<parallel>], iteration_bounds = array<i64: 2>, scalar_prefetch = 0 : i64, scratch_operands = 0 : i64, tpu.core_type = #tpu.core_type<tc>, window_params = [{transform_indices = @transform_0, window_bounds = array<i64: 128, 8>}, {pipeline_mode = #tpu.pipeline_mode<synchronous>, transform_indices = @transform_1, window_bounds = array<i64: 32, 8>}, {pipeline_mode = #tpu.pipeline_mode<synchronous>, transform_indices = @transform_2, window_bounds = array<i64: 32, 1>}, {pipeline_mode = #tpu.pipeline_mode<synchronous>, transform_indices = @transform_3, window_bounds = array<i64: 32, 32>}, {pipeline_mode = #tpu.pipeline_mode<synchronous>, transform_indices = @transform_4, window_bounds = array<i64: 32, 1>}, {pipeline_mode = #tpu.pipeline_mode<synchronous>, transform_indices = @transform_5, window_bounds = array<i64: 16, 32>}, {pipeline_mode = #tpu.pipeline_mode<synchronous>, transform_indices = @transform_6, window_bounds = array<i64: 1, 16>}, {transform_indices = @transform_7, window_bounds = array<i64: 128, 16>}]} {
    %c0 = arith.constant 0 : index
    %c0_0 = arith.constant 0 : index
    %0 = vector.load %arg1[%c0, %c0_0] : memref<128x8xf32, #tpu.memory_space<vmem>>, vector<128x8xf32>
    %c0_1 = arith.constant 0 : index
    %c0_2 = arith.constant 0 : index
    %1 = vector.load %arg2[%c0_1, %c0_2] : memref<32x8xf32, #tpu.memory_space<vmem>>, vector<32x8xf32>
    %cst = arith.constant dense<0.000000e+00> : vector<32x128xf32>
    %2 = tpu.matmul %1, %0, %cst {dimension_numbers = #tpu.dot_dimension_numbers<[1], [1], [0], [0], [0, 0, 1, 0], [], []>} : vector<32x8xf32>, vector<128x8xf32>, vector<32x128xf32> -> vector<32x128xf32>
    %c0_3 = arith.constant 0 : index
    %c0_4 = arith.constant 0 : index
    %3 = vector.load %arg3[%c0_3, %c0_4] : memref<32x1xf32, #tpu.memory_space<vmem>>, vector<32x1xf32>
    %4 = vector.broadcast %3 : vector<32x1xf32> to vector<32x128xf32>
    %5 = arith.addf %2, %4 : vector<32x128xf32>
    %cst_5 = arith.constant 0.000000e+00 : f32
    %6 = vector.broadcast %cst_5 : f32 to vector<32x128xf32>
    %7 = arith.maximumf %5, %6 : vector<32x128xf32>
    %c0_6 = arith.constant 0 : index
    %c0_7 = arith.constant 0 : index
    %8 = vector.load %arg4[%c0_6, %c0_7] : memref<32x32xf32, #tpu.memory_space<vmem>>, vector<32x32xf32>
    %cst_8 = arith.constant dense<0.000000e+00> : vector<32x128xf32>
    %9 = tpu.matmul %8, %7, %cst_8 {dimension_numbers = #tpu.dot_dimension_numbers<[1], [0], [0], [1], [0, 0, 1, 1], [], []>} : vector<32x32xf32>, vector<32x128xf32>, vector<32x128xf32> -> vector<32x128xf32>
    %c0_9 = arith.constant 0 : index
    %c0_10 = arith.constant 0 : index
    %10 = vector.load %arg5[%c0_9, %c0_10] : memref<32x1xf32, #tpu.memory_space<vmem>>, vector<32x1xf32>
    %11 = vector.broadcast %10 : vector<32x1xf32> to vector<32x128xf32>
    %12 = arith.addf %9, %11 : vector<32x128xf32>
    %cst_11 = arith.constant 0.000000e+00 : f32
    %13 = vector.broadcast %cst_11 : f32 to vector<32x128xf32>
    %14 = arith.maximumf %12, %13 : vector<32x128xf32>
    %15 = arith.addf %14, %7 : vector<32x128xf32>
    %16 = tpu.transpose %15, [1, 0] : vector<32x128xf32> -> vector<128x32xf32>
    %c0_12 = arith.constant 0 : index
    %c0_13 = arith.constant 0 : index
    %17 = vector.load %arg6[%c0_12, %c0_13] : memref<16x32xf32, #tpu.memory_space<vmem>>, vector<16x32xf32>
    %cst_14 = arith.constant dense<0.000000e+00> : vector<128x16xf32>
    %18 = tpu.matmul %16, %17, %cst_14 {dimension_numbers = #tpu.dot_dimension_numbers<[1], [1], [0], [0], [0, 0, 1, 0], [], []>} : vector<128x32xf32>, vector<16x32xf32>, vector<128x16xf32> -> vector<128x16xf32>
    %c0_15 = arith.constant 0 : index
    %c0_16 = arith.constant 0 : index
    %19 = vector.load %arg7[%c0_15, %c0_16] : memref<1x16xf32, #tpu.memory_space<vmem>>, vector<1x16xf32>
    %20 = vector.broadcast %19 : vector<1x16xf32> to vector<128x16xf32>
    %21 = arith.addf %18, %20 : vector<128x16xf32>
    %c0_17 = arith.constant 0 : index
    %c0_18 = arith.constant 0 : index
    %22 = vector.load %arg8[%c0_17, %c0_18] : memref<128x16xf32, #tpu.memory_space<vmem>>, vector<128x16xf32>
    tpu.vector_store %arg8[%c0_17, %c0_18], %21 {strides = array<i32>} : memref<128x16xf32, #tpu.memory_space<vmem>>, vector<128x16xf32>,
    return
  }
  func.func @transform_0(%arg0: i32) -> (i32, i32) {
    %c0_i32 = arith.constant 0 : i32
    %c0_i32_0 = arith.constant 0 : i32
    return %arg0, %c0_i32 : i32, i32
  }
  func.func @transform_1(%arg0: i32) -> (i32, i32) {
    %c0_i32 = arith.constant 0 : i32
    %c0_i32_0 = arith.constant 0 : i32
    %c0_i32_1 = arith.constant 0 : i32
    return %c0_i32, %c0_i32_0 : i32, i32
  }
  func.func @transform_2(%arg0: i32) -> (i32, i32) {
    %c0_i32 = arith.constant 0 : i32
    %c0_i32_0 = arith.constant 0 : i32
    %c0_i32_1 = arith.constant 0 : i32
    return %c0_i32, %c0_i32_0 : i32, i32
  }
  func.func @transform_3(%arg0: i32) -> (i32, i32) {
    %c0_i32 = arith.constant 0 : i32
    %c0_i32_0 = arith.constant 0 : i32
    %c0_i32_1 = arith.constant 0 : i32
    return %c0_i32, %c0_i32_0 : i32, i32
  }
  func.func @transform_4(%arg0: i32) -> (i32, i32) {
    %c0_i32 = arith.constant 0 : i32
    %c0_i32_0 = arith.constant 0 : i32
    %c0_i32_1 = arith.constant 0 : i32
    return %c0_i32, %c0_i32_0 : i32, i32
  }
  func.func @transform_5(%arg0: i32) -> (i32, i32) {
    %c0_i32 = arith.constant 0 : i32
    %c0_i32_0 = arith.constant 0 : i32
    %c0_i32_1 = arith.constant 0 : i32
    return %c0_i32, %c0_i32_0 : i32, i32
  }
  func.func @transform_6(%arg0: i32) -> (i32, i32) {
    %c0_i32 = arith.constant 0 : i32
    %c0_i32_0 = arith.constant 0 : i32
    %c0_i32_1 = arith.constant 0 : i32
    return %c0_i32, %c0_i32_0 : i32, i32
  }
  func.func @transform_7(%arg0: i32) -> (i32, i32) {
    %c0_i32 = arith.constant 0 : i32
    %c0_i32_0 = arith.constant 0 : i32
    return %arg0, %c0_i32 : i32, i32
  }
}

</mosaic_0001>

<llo_original>
// kernel: coordinate_embedding.1
$region0: #{coordinate_embedding.1}
  #allocation0 [shape = 'u32[]', space=smem, size = 0x4, offset = 0x4, fixed_abs, tag = 'smem constant byte address 0x4 - core index']
  #allocation1 [shape = 'u32[144,128]{1,0:T(1,128)}', space=vmem, size = 0x12000, scoped, tag = 'internal scratch']
  %s0 = inlined_call_operand.vmem [shape: f32[256,8], index: 0, kind: input, shape index: {}]
  %s1 = inlined_call_operand.vmem [shape: f32[32,8], index: 1, kind: input, shape index: {}]
  %s2 = inlined_call_operand.vmem [shape: f32[32,1], index: 2, kind: input, shape index: {}]
  %s3 = inlined_call_operand.vmem [shape: f32[32,32], index: 3, kind: input, shape index: {}]
  %s4 = inlined_call_operand.vmem [shape: f32[32,1], index: 4, kind: input, shape index: {}]
  %s5 = inlined_call_operand.vmem [shape: f32[16,32], index: 5, kind: input, shape index: {}]
  %s6 = inlined_call_operand.vmem [shape: f32[1,16], index: 6, kind: input, shape index: {}]
  %s7 = inlined_call_operand.vmem [shape: f32[256,16], index: 7, kind: output, shape index: {}]
  %s8 = sld [smem:[#allocation0]]
  $region61: #{coordinate_embedding.1} parent=0
    _
  %s10 = ssub.s32 1, %s8
  %s11 = scalar_select 0, %s10, %s8
  loop: start=0, step=1, limit=4
  $region2: #{coordinate_embedding.1} parent=0 // loop_pre_header
    _
  $region3: #{coordinate_embedding.1} parent=0 // loop_header
    %s13 = sphi 0, %s17
    %p14 = scmp.ge.s32.totalorder %s13, 4
    %s23 = sphi 0, %s25
    %s26 = sphi 0, %s23
    %s27 = sphi 0, %s26
    %s43 = sphi 0, %s27
    %s47 = sphi 0, %s47
    %s49 = sphi 0, %s47
    %s50 = sphi 0, %s49
    %s64 = sphi 0, %s50
    %s68 = sphi 0, %s68
    %s70 = sphi 0, %s68
    %s71 = sphi 0, %s70
    %s85 = sphi 0, %s71
    %s89 = sphi 0, %s89
    %s91 = sphi 0, %s89
    %s92 = sphi 0, %s91
    %s106 = sphi 0, %s92
    %s110 = sphi 0, %s110
    %s112 = sphi 0, %s110
    %s113 = sphi 0, %s112
    %s127 = sphi 0, %s113
    %s131 = sphi 0, %s131
    %s133 = sphi 0, %s131
    %s134 = sphi 0, %s133
    %s148 = sphi 0, %s134
    %s152 = sphi 0, %s152
    %s154 = sphi 0, %s152
    %s155 = sphi 0, %s154
    %s169 = sphi 0, %s155
    %s175 = sphi 0, %s177
    %s178 = sphi 0, %s175
    %s179 = sphi 0, %s178
    %s195 = sphi 0, %s179
  $region4: #{coordinate_embedding.1} parent=0 // loop_header_branch
    %16 = sbr.rel (%p14) target = $region8
  $region5: #{coordinate_embedding.1} parent=0 // loop_body
    %s18 = ssub.s32 %s13, 1
    %s19 = ssub.s32 %s13, 2
    %s20 = sadd.s32 %s13, 1
    %s21 = ssub.s32 %s13, %s20
    %p22 = scmp.eq.s32.totalorder %s21, 0
    %s24 = sadd.s32 %s23, 1
    %s25 = scalar_select %p22, %s23, %s24
    %p28 = pneg %p22
    %p29 = scmp.eq.s32.totalorder %s13, 1
    %p30 = por %p28, %p29
    %p31 = scmp.ne.s32.totalorder %s23, %s26
    %p32 = scmp.eq.s32.totalorder %s13, 0
    %p33 = por %p31, %p32
    %p34 = scmp.ne.s32.totalorder %s23, %s26
    %p35 = scmp.eq.s32.totalorder %s18, 1
    %p36 = por %p34, %p35
    %p37 = scmp.ne.s32.totalorder %s26, %s27
    %p38 = scmp.eq.s32.totalorder %s18, 0
    %p39 = por %p37, %p38
    %p40 = scmp.ne.s32.totalorder %s26, %s27
    %p41 = scmp.eq.s32.totalorder %s19, 1
    %p42 = por %p40, %p41
    %p44 = scmp.ne.s32.totalorder %s27, %s43
    %p45 = scmp.eq.s32.totalorder %s19, 0
    %p46 = por %p44, %p45
    %s48 = sadd.s32 %s47, 1
    %p51 = scmp.eq.s32.totalorder %s13, 1
    %p52 = scmp.ne.s32.totalorder %s47, %s49
    %p53 = scmp.eq.s32.totalorder %s13, 0
    %p54 = por %p52, %p53
    %p55 = scmp.ne.s32.totalorder %s47, %s49
    %p56 = scmp.eq.s32.totalorder %s18, 1
    %p57 = por %p55, %p56
    %p58 = scmp.ne.s32.totalorder %s49, %s50
    %p59 = scmp.eq.s32.totalorder %s18, 0
    %p60 = por %p58, %p59
    %p61 = scmp.ne.s32.totalorder %s49, %s50
    %p62 = scmp.eq.s32.totalorder %s19, 1
    %p63 = por %p61, %p62
    %p65 = scmp.ne.s32.totalorder %s50, %s64
    %p66 = scmp.eq.s32.totalorder %s19, 0
    %p67 = por %p65, %p66
    %s69 = sadd.s32 %s68, 1
    %p72 = scmp.eq.s32.totalorder %s13, 1
    %p73 = scmp.ne.s32.totalorder %s68, %s70
    %p74 = scmp.eq.s32.totalorder %s13, 0
    %p75 = por %p73, %p74
    %p76 = scmp.ne.s32.totalorder %s68, %s70
    %p77 = scmp.eq.s32.totalorder %s18, 1
    %p78 = por %p76, %p77
    %p79 = scmp.ne.s32.totalorder %s70, %s71
    %p80 = scmp.eq.s32.totalorder %s18, 0
    %p81 = por %p79, %p80
    %p82 = scmp.ne.s32.totalorder %s70, %s71
    %p83 = scmp.eq.s32.totalorder %s19, 1
    %p84 = por %p82, %p83
    %p86 = scmp.ne.s32.totalorder %s71, %s85
    %p87 = scmp.eq.s32.totalorder %s19, 0
    %p88 = por %p86, %p87
    %s90 = sadd.s32 %s89, 1
    %p93 = scmp.eq.s32.totalorder %s13, 1
    %p94 = scmp.ne.s32.totalorder %s89, %s91
    %p95 = scmp.eq.s32.totalorder %s13, 0
    %p96 = por %p94, %p95
    %p97 = scmp.ne.s32.totalorder %s89, %s91
    %p98 = scmp.eq.s32.totalorder %s18, 1
    %p99 = por %p97, %p98
    %p100 = scmp.ne.s32.totalorder %s91, %s92
    %p101 = scmp.eq.s32.totalorder %s18, 0
    %p102 = por %p100, %p101
    %p103 = scmp.ne.s32.totalorder %s91, %s92
    %p104 = scmp.eq.s32.totalorder %s19, 1
    %p105 = por %p103, %p104
    %p107 = scmp.ne.s32.totalorder %s92, %s106
    %p108 = scmp.eq.s32.totalorder %s19, 0
    %p109 = por %p107, %p108
    %s111 = sadd.s32 %s110, 1
    %p114 = scmp.eq.s32.totalorder %s13, 1
    %p115 = scmp.ne.s32.totalorder %s110, %s112
    %p116 = scmp.eq.s32.totalorder %s13, 0
    %p117 = por %p115, %p116
    %p118 = scmp.ne.s32.totalorder %s110, %s112
    %p119 = scmp.eq.s32.totalorder %s18, 1
    %p120 = por %p118, %p119
    %p121 = scmp.ne.s32.totalorder %s112, %s113
    %p122 = scmp.eq.s32.totalorder %s18, 0
    %p123 = por %p121, %p122
    %p124 = scmp.ne.s32.totalorder %s112, %s113
    %p125 = scmp.eq.s32.totalorder %s19, 1
    %p126 = por %p124, %p125
    %p128 = scmp.ne.s32.totalorder %s113, %s127
    %p129 = scmp.eq.s32.totalorder %s19, 0
    %p130 = por %p128, %p129
    %s132 = sadd.s32 %s131, 1
    %p135 = scmp.eq.s32.totalorder %s13, 1
    %p136 = scmp.ne.s32.totalorder %s131, %s133
    %p137 = scmp.eq.s32.totalorder %s13, 0
    %p138 = por %p136, %p137
    %p139 = scmp.ne.s32.totalorder %s131, %s133
    %p140 = scmp.eq.s32.totalorder %s18, 1
    %p141 = por %p139, %p140
    %p142 = scmp.ne.s32.totalorder %s133, %s134
    %p143 = scmp.eq.s32.totalorder %s18, 0
    %p144 = por %p142, %p143
    %p145 = scmp.ne.s32.totalorder %s133, %s134
    %p146 = scmp.eq.s32.totalorder %s19, 1
    %p147 = por %p145, %p146
    %p149 = scmp.ne.s32.totalorder %s134, %s148
    %p150 = scmp.eq.s32.totalorder %s19, 0
    %p151 = por %p149, %p150
    %s153 = sadd.s32 %s152, 1
    %p156 = scmp.eq.s32.totalorder %s13, 1
    %p157 = scmp.ne.s32.totalorder %s152, %s154
    %p158 = scmp.eq.s32.totalorder %s13, 0
    %p159 = por %p157, %p158
    %p160 = scmp.ne.s32.totalorder %s152, %s154
    %p161 = scmp.eq.s32.totalorder %s18, 1
    %p162 = por %p160, %p161
    %p163 = scmp.ne.s32.totalorder %s154, %s155
    %p164 = scmp.eq.s32.totalorder %s18, 0
    %p165 = por %p163, %p164
    %p166 = scmp.ne.s32.totalorder %s154, %s155
    %p167 = scmp.eq.s32.totalorder %s19, 1
    %p168 = por %p166, %p167
    %p170 = scmp.ne.s32.totalorder %s155, %s169
    %p171 = scmp.eq.s32.totalorder %s19, 0
    %p172 = por %p170, %p171
    %s173 = ssub.s32 %s13, %s20
    %p174 = scmp.eq.s32.totalorder %s173, 0
    %s176 = sadd.s32 %s175, 1
    %s177 = scalar_select %p174, %s175, %s176
    %p180 = pneg %p174
    %p181 = scmp.eq.s32.totalorder %s13, 1
    %p182 = por %p180, %p181
    %p183 = scmp.ne.s32.totalorder %s175, %s178
    %p184 = scmp.eq.s32.totalorder %s13, 0
    %p185 = por %p183, %p184
    %p186 = scmp.ne.s32.totalorder %s175, %s178
    %p187 = scmp.eq.s32.totalorder %s18, 1
    %p188 = por %p186, %p187
    %p189 = scmp.ne.s32.totalorder %s178, %s179
    %p190 = scmp.eq.s32.totalorder %s18, 0
    %p191 = por %p189, %p190
    %p192 = scmp.ne.s32.totalorder %s178, %s179
    %p193 = scmp.eq.s32.totalorder %s19, 1
    %p194 = por %p192, %p193
    %p196 = scmp.ne.s32.totalorder %s179, %s195
    %p197 = scmp.eq.s32.totalorder %s19, 0
    %p198 = por %p196, %p197
    %p199 = scmp.le.s32.totalorder 1, %s13
    %p200 = scmp.lt.s32.totalorder %s13, 3
    %p201 = pnand %p199, %p200
    %p202 = pneg %p201
    // Predicated region
    $region9: #{coordinate_embedding.1} parent=5 // pred_check
      _
    $region10: #{coordinate_embedding.1} parent=5 // pred_check_branch
      %204 = sbr.rel (%p201) target = $region12
    $region11: #{coordinate_embedding.1} parent=5 // pred_region
      %s205 = ssub.s32 %s13, 1
      // Predicated region
      $region13: #{coordinate_embedding.1} parent=11 // pred_check
        %p206 = pneg %p60
      $region14: #{coordinate_embedding.1} parent=11 // pred_check_branch
        %208 = sbr.rel (%p206) target = $region16
      $region15: #{coordinate_embedding.1} parent=11 // pred_region
        _
      $region16: #{coordinate_embedding.1} parent=11 // pred_fallthru
        _
      // Predicated region
      $region17: #{coordinate_embedding.1} parent=11 // pred_check
        %p209 = pneg %p81
      $region18: #{coordinate_embedding.1} parent=11 // pred_check_branch
        %211 = sbr.rel (%p209) target = $region20
      $region19: #{coordinate_embedding.1} parent=11 // pred_region
        _
      $region20: #{coordinate_embedding.1} parent=11 // pred_fallthru
        _
      // Predicated region
      $region21: #{coordinate_embedding.1} parent=11 // pred_check
        %p212 = pneg %p102
      $region22: #{coordinate_embedding.1} parent=11 // pred_check_branch
        %214 = sbr.rel (%p212) target = $region24
      $region23: #{coordinate_embedding.1} parent=11 // pred_region
        _
      $region24: #{coordinate_embedding.1} parent=11 // pred_fallthru
        _
      // Predicated region
      $region25: #{coordinate_embedding.1} parent=11 // pred_check
        %p215 = pneg %p123
      $region26: #{coordinate_embedding.1} parent=11 // pred_check_branch
        %217 = sbr.rel (%p215) target = $region28
      $region27: #{coordinate_embedding.1} parent=11 // pred_region
        _
      $region28: #{coordinate_embedding.1} parent=11 // pred_fallthru
        _
      // Predicated region
      $region29: #{coordinate_embedding.1} parent=11 // pred_check
        %p218 = pneg %p144
      $region30: #{coordinate_embedding.1} parent=11 // pred_check_branch
        %220 = sbr.rel (%p218) target = $region32
      $region31: #{coordinate_embedding.1} parent=11 // pred_region
        _
      $region32: #{coordinate_embedding.1} parent=11 // pred_fallthru
        _
      // Predicated region
      $region33: #{coordinate_embedding.1} parent=11 // pred_check
        %p221 = pneg %p165
      $region34: #{coordinate_embedding.1} parent=11 // pred_check_branch
        %223 = sbr.rel (%p221) target = $region36
      $region35: #{coordinate_embedding.1} parent=11 // pred_region
        _
      $region36: #{coordinate_embedding.1} parent=11 // pred_fallthru
        _
    $region12: #{coordinate_embedding.1} parent=5 // pred_fallthru
      _
    %p224 = scmp.lt.s32.totalorder %s13, 2
    // Predicated region
    $region37: #{coordinate_embedding.1} parent=5 // pred_check
      %p225 = pneg %p224
    $region38: #{coordinate_embedding.1} parent=5 // pred_check_branch
      %227 = sbr.rel (%p225) target = $region40
    $region39: #{coordinate_embedding.1} parent=5 // pred_region
      // Predicated region
      $region41: #{coordinate_embedding.1} parent=39 // pred_check
        %p228 = pneg %p33
      $region42: #{coordinate_embedding.1} parent=39 // pred_check_branch
        %230 = sbr.rel (%p228) target = $region44
      $region43: #{coordinate_embedding.1} parent=39 // pred_region
        %s231 = smul.u32 16, %s13
        %p232 = scmp.lt.s32.totalorder %s231, 31
        %s233 = scalar_select %p232, %s231, 31
        %s234 = smul.addr %s233, 8
        %s235 = scalar_lea.vmem %s0, %s234
        %s236 = smul.u32 16, %s13
      $region44: #{coordinate_embedding.1} parent=39 // pred_fallthru
        _
    $region40: #{coordinate_embedding.1} parent=5 // pred_fallthru
      _
    %p237 = scmp.le.s32.totalorder 1, %s13
    %p238 = scmp.lt.s32.totalorder %s13, 3
    %p239 = pnand %p237, %p238
    %p240 = pneg %p239
    // Predicated region
    $region45: #{coordinate_embedding.1} parent=5 // pred_check
      _
    $region46: #{coordinate_embedding.1} parent=5 // pred_check_branch
      %242 = sbr.rel (%p239) target = $region48
    $region47: #{coordinate_embedding.1} parent=5 // pred_region
      %s243 = ssub.s32 %s13, 1
      %s244 = smul.u32 16, %s18
      %p245 = scmp.lt.s32.totalorder %s244, 31
      %s246 = scalar_select %p245, %s244, 31
      %s247 = smul.addr %s246, 8
      %s248 = scalar_lea.vmem %s0, %s247
      %p249 = pneg %p39
      %p250 = pneg %p36
      %p251 = pneg %p60
      %p252 = pneg %p57
      %p253 = pneg %p81
      %p254 = pneg %p78
      %p255 = pneg %p102
      %p256 = pneg %p99
      %p257 = pneg %p123
      %p258 = pneg %p120
      %p259 = pneg %p144
      %p260 = pneg %p141
      %p261 = pneg %p165
      %p262 = pneg %p162
      %p263 = pneg %p191
      %p264 = pneg %p188
      %s265 = smul.u32 16, %s18
      %p266 = scmp.lt.s32.totalorder %s265, 31
      %s267 = scalar_select %p266, %s265, 31
      %s268 = smul.addr %s267, 8
      %s269 = scalar_lea.vmem %s7, %s268
      %s270 = smul.u32 16, %s18
      %p271 = scmp.lt.s32.totalorder %s270, 31
      %s272 = scalar_select %p271, %s270, 31
      %s273 = smul.addr %s272, 8
      %s274 = scalar_lea.vmem %s0, %s273
      %s275 = smul.u32 16, %s18
      %s276 = smul.u32 16, %s18
      %p277 = scmp.lt.s32.totalorder %s276, 31
      %s278 = scalar_select %p277, %s276, 31
      %s279 = smul.addr %s278, 8
      %s280 = scalar_lea.vmem %s7, %s279
      %s281 = smul.u32 16, %s18
      %v282 = vld [vmem:[%s274] sm:$0xff]
      %v283 = vld [vmem:[%s274 + $0x8] sm:$0xff]
      %v284 = vld [vmem:[%s274 + $0x10] sm:$0xff]
      %v285 = vld [vmem:[%s274 + $0x18] sm:$0xff]
      %v286 = vld [vmem:[%s274 + $0x20] sm:$0xff]
      %v287 = vld [vmem:[%s274 + $0x28] sm:$0xff]
      %v288 = vld [vmem:[%s274 + $0x30] sm:$0xff]
      %v289 = vld [vmem:[%s274 + $0x38] sm:$0xff]
      %v290 = vld [vmem:[%s274 + $0x40] sm:$0xff]
      %v291 = vld [vmem:[%s274 + $0x48] sm:$0xff]
      %v292 = vld [vmem:[%s274 + $0x50] sm:$0xff]
      %v293 = vld [vmem:[%s274 + $0x58] sm:$0xff]
      %v294 = vld [vmem:[%s274 + $0x60] sm:$0xff]
      %v295 = vld [vmem:[%s274 + $0x68] sm:$0xff]
      %v296 = vld [vmem:[%s274 + $0x70] sm:$0xff]
      %v297 = vld [vmem:[%s274 + $0x78] sm:$0xff]
      %v298 = vld [vmem:[%s1] sm:$0xff]
      %v299 = vld [vmem:[%s1 + $0x8] sm:$0xff]
      %v300 = vld [vmem:[%s1 + $0x10] sm:$0xff]
      %v301 = vld [vmem:[%s1 + $0x18] sm:$0xff]
      %v302 = vld [vmem:[%s2] sm:$0xff]
      %v303 = vld [vmem:[%s2 + $0x8] sm:$0xff]
      %v304 = vld [vmem:[%s2 + $0x10] sm:$0xff]
      %v305 = vld [vmem:[%s2 + $0x18] sm:$0xff]
      %307 = vset.pattern.permute.xlu0 0
      %308 = vperm.xlu0 %307, %v302
      %v309 = vpop.permute.xlu0 %308
      %312 = vset.pattern.permute.xlu0 0
      %313 = vperm.xlu0 %312, %v303
      %v314 = vpop.permute.xlu0 %313
      %317 = vset.pattern.permute.xlu0 0
      %318 = vperm.xlu0 %317, %v304
      %v319 = vpop.permute.xlu0 %318
      %322 = vset.pattern.permute.xlu0 0
      %323 = vperm.xlu0 %322, %v305
      %v324 = vpop.permute.xlu0 %323
      %vm326 = vcmask 64512
      %v328 = vsel %vm326, %v298, 0
      %v331 = vsel %vm326, %v299, 0
      %v334 = vsel %vm326, %v300, 0
      %v337 = vsel %vm326, %v301, 0
      %v340 = vsel %vm326, %v282, 0
      %v343 = vsel %vm326, %v283, 0
      %v346 = vsel %vm326, %v284, 0
      %v349 = vsel %vm326, %v285, 0
      %v352 = vsel %vm326, %v286, 0
      %v355 = vsel %vm326, %v287, 0
      %v358 = vsel %vm326, %v288, 0
      %v361 = vsel %vm326, %v289, 0
      %v364 = vsel %vm326, %v290, 0
      %v367 = vsel %vm326, %v291, 0
      %v370 = vsel %vm326, %v292, 0
      %v373 = vsel %vm326, %v293, 0
      %v376 = vsel %vm326, %v294, 0
      %v379 = vsel %vm326, %v295, 0
      %v382 = vsel %vm326, %v296, 0
      %v385 = vsel %vm326, %v297, 0
      %387 = vmatprep.subr.mxu0 0.0
      %388 = vmatpush1.xpose.msra.mxu0 %v340
      %389 = vmatprep.subr.mxu0 0.0
      %390 = vmatpush1.xpose.msra.mxu0 %v343
      %391 = vmatprep.subr.mxu0 0.0
      %392 = vmatpush1.xpose.msra.mxu0 %v346
      %393 = vmatprep.subr.mxu0 0.0
      %394 = vmatpush1.xpose.msra.mxu0 %v349
      %395 = vmatprep.subr.mxu0 0.0
      %396 = vmatpush1.xpose.msra.mxu0 %v352
      %397 = vmatprep.subr.mxu0 0.0
      %398 = vmatpush1.xpose.msra.mxu0 %v355
      %399 = vmatprep.subr.mxu0 0.0
      %400 = vmatpush1.xpose.msra.mxu0 %v358
      %401 = vmatprep.subr.mxu0 0.0
      %402 = vmatpush1.xpose.msra.mxu0 %v361
      %403 = vmatprep.subr.mxu0 0.0
      %404 = vmatpush1.xpose.msra.mxu0 %v364
      %405 = vmatprep.subr.mxu0 0.0
      %406 = vmatpush1.xpose.msra.mxu0 %v367
      %407 = vmatprep.subr.mxu0 0.0
      %408 = vmatpush1.xpose.msra.mxu0 %v370
      %409 = vmatprep.subr.mxu0 0.0
      %410 = vmatpush1.xpose.msra.mxu0 %v373
      %411 = vmatprep.subr.mxu0 0.0
      %412 = vmatpush1.xpose.msra.mxu0 %v376
      %413 = vmatprep.subr.mxu0 0.0
      %414 = vmatpush1.xpose.msra.mxu0 %v379
      %415 = vmatprep.subr.mxu0 0.0
      %416 = vmatpush1.xpose.msra.mxu0 %v382
      %417 = vmatprep.subr.mxu0 0.0
      %418 = vmatpush1.xpose.msra.mxu0 %v385
      %419 = vmatprep.subr.mxu0 0.0
      %420 = vmatpush1.xpose.msra.mxu0 0.0
      %421 = vmatprep.subr.mxu0 0.0
      %422 = vmatpush1.xpose.msra.mxu0 0.0
      %423 = vmatprep.subr.mxu0 0.0
      %424 = vmatpush1.xpose.msra.mxu0 0.0
      %425 = vmatprep.subr.mxu0 0.0
      %426 = vmatpush1.xpose.msra.mxu0 0.0
      %427 = vmatprep.subr.mxu0 0.0
      %428 = vmatpush1.xpose.msra.mxu0 0.0
      %429 = vmatprep.subr.mxu0 0.0
      %430 = vmatpush1.xpose.msra.mxu0 0.0
      %431 = vmatprep.subr.mxu0 0.0
      %432 = vmatpush1.xpose.msra.mxu0 0.0
      %433 = vmatprep.subr.mxu0 0.0
      %434 = vmatpush1.xpose.msra.mxu0 0.0
      %435 = vmatprep.subr.mxu0 0.0
      %436 = vmatpush1.xpose.msra.mxu0 0.0
      %437 = vmatprep.subr.mxu0 0.0
      %438 = vmatpush1.xpose.msra.mxu0 0.0
      %439 = vmatprep.subr.mxu0 0.0
      %440 = vmatpush1.xpose.msra.mxu0 0.0
      %441 = vmatprep.subr.mxu0 0.0
      %442 = vmatpush1.xpose.msra.mxu0 0.0
      %443 = vmatprep.subr.mxu0 0.0
      %444 = vmatpush1.xpose.msra.mxu0 0.0
      %445 = vmatprep.subr.mxu0 0.0
      %446 = vmatpush1.xpose.msra.mxu0 0.0
      %447 = vmatprep.subr.mxu0 0.0
      %448 = vmatpush1.xpose.msra.mxu0 0.0
      %449 = vmatprep.subr.mxu0 0.0
      %450 = vmatpush1.xpose.msra.mxu0 0.0
      %451 = vmatprep.mubr.f32.mxu0 0.0
      %452 = vmatmul.mubr.f32.gmra.mrb[0].mxu0 %v328
      %v453 = vpop.f32.mrb[0].mxu0
      %v454 = vadd.f32 %v309, %v453
      %v455 = vpop.f32.mrb[0].mxu0
      %456 = vmatprep.mubr.f32.mxu0 0.0
      %457 = vmatmul.mubr.f32.gmra.mrb[0].mxu0 %v331
      %v458 = vpop.f32.mrb[0].mxu0
      %v459 = vadd.f32 %v314, %v458
      %v460 = vpop.f32.mrb[0].mxu0
      %461 = vmatprep.mubr.f32.mxu0 0.0
      %462 = vmatmul.mubr.f32.gmra.mrb[0].mxu0 %v334
      %v463 = vpop.f32.mrb[0].mxu0
      %v464 = vadd.f32 %v319, %v463
      %v465 = vpop.f32.mrb[0].mxu0
      %466 = vmatprep.mubr.f32.mxu0 0.0
      %467 = vmatmul.mubr.f32.gmra.mrb[0].mxu0 %v337
      %v468 = vpop.f32.mrb[0].mxu0
      %v469 = vadd.f32 %v324, %v468
      %v470 = vpop.f32.mrb[0].mxu0
      %471 = vdwg.mxu0
      %v472 = vmax.f32 %v454, 0.0
      %v473 = vmax.f32 %v459, 0.0
      %v474 = vmax.f32 %v464, 0.0
      %v475 = vmax.f32 %v469, 0.0
      %v476 = vld [vmem:[%s3] sm:$0xff]
      %v477 = vld [vmem:[%s3 + $0x8] sm:$0xff]
      %v478 = vld [vmem:[%s3 + $0x10] sm:$0xff]
      %v479 = vld [vmem:[%s3 + $0x18] sm:$0xff]
      %v480 = vld [vmem:[%s4] sm:$0xff]
      %v481 = vld [vmem:[%s4 + $0x8] sm:$0xff]
      %v482 = vld [vmem:[%s4 + $0x10] sm:$0xff]
      %v483 = vld [vmem:[%s4 + $0x18] sm:$0xff]
      %485 = vset.pattern.permute.xlu0 0
      %486 = vperm.xlu0 %485, %v480
      %v487 = vpop.permute.xlu0 %486
      %490 = vset.pattern.permute.xlu0 0
      %491 = vperm.xlu0 %490, %v481
      %v492 = vpop.permute.xlu0 %491
      %495 = vset.pattern.permute.xlu0 0
      %496 = vperm.xlu0 %495, %v482
      %v497 = vpop.permute.xlu0 %496
      %500 = vset.pattern.permute.xlu0 0
      %501 = vperm.xlu0 %500, %v483
      %v502 = vpop.permute.xlu0 %501
      %vm504 = vcmask 261120
      %v506 = vsel %vm504, %v476, 0
      %v509 = vsel %vm504, %v477, 0
      %v512 = vsel %vm504, %v478, 0
      %v515 = vsel %vm504, %v479, 0
      %517 = vmatprep.subr.mxu0 0.0
      %518 = vmatpush1.msra.mxu0 %v472
      %519 = vmatprep.subr.mxu0 0.0
      %520 = vmatpush1.msra.mxu0 %v473
      %521 = vmatprep.subr.mxu0 0.0
      %522 = vmatpush1.msra.mxu0 %v474
      %523 = vmatprep.subr.mxu0 0.0
      %524 = vmatpush1.msra.mxu0 %v475
      %525 = vmatprep.subr.mxu0 0.0
      %526 = vmatpush1.msra.mxu0 0.0
      %527 = vmatprep.subr.mxu0 0.0
      %528 = vmatpush1.msra.mxu0 0.0
      %529 = vmatprep.subr.mxu0 0.0
      %530 = vmatpush1.msra.mxu0 0.0
      %531 = vmatprep.subr.mxu0 0.0
      %532 = vmatpush1.msra.mxu0 0.0
      %533 = vmatprep.subr.mxu0 0.0
      %534 = vmatpush1.msra.mxu0 0.0
      %535 = vmatprep.subr.mxu0 0.0
      %536 = vmatpush1.msra.mxu0 0.0
      %537 = vmatprep.subr.mxu0 0.0
      %538 = vmatpush1.msra.mxu0 0.0
      %539 = vmatprep.subr.mxu0 0.0
      %540 = vmatpush1.msra.mxu0 0.0
      %541 = vmatprep.subr.mxu0 0.0
      %542 = vmatpush1.msra.mxu0 0.0
      %543 = vmatprep.subr.mxu0 0.0
      %544 = vmatpush1.msra.mxu0 0.0
      %545 = vmatprep.subr.mxu0 0.0
      %546 = vmatpush1.msra.mxu0 0.0
      %547 = vmatprep.subr.mxu0 0.0
      %548 = vmatpush1.msra.mxu0 0.0
      %549 = vmatprep.subr.mxu0 0.0
      %550 = vmatpush1.msra.mxu0 0.0
      %551 = vmatprep.subr.mxu0 0.0
      %552 = vmatpush1.msra.mxu0 0.0
      %553 = vmatprep.subr.mxu0 0.0
      %554 = vmatpush1.msra.mxu0 0.0
      %555 = vmatprep.subr.mxu0 0.0
      %556 = vmatpush1.msra.mxu0 0.0
      %557 = vmatprep.subr.mxu0 0.0
      %558 = vmatpush1.msra.mxu0 0.0
      %559 = vmatprep.subr.mxu0 0.0
      %560 = vmatpush1.msra.mxu0 0.0
      %561 = vmatprep.subr.mxu0 0.0
      %562 = vmatpush1.msra.mxu0 0.0
      %563 = vmatprep.subr.mxu0 0.0
      %564 = vmatpush1.msra.mxu0 0.0
      %565 = vmatprep.subr.mxu0 0.0
      %566 = vmatpush1.msra.mxu0 0.0
      %567 = vmatprep.subr.mxu0 0.0
      %568 = vmatpush1.msra.mxu0 0.0
      %569 = vmatprep.subr.mxu0 0.0
      %570 = vmatpush1.msra.mxu0 0.0
      %571 = vmatprep.subr.mxu0 0.0
      %572 = vmatpush1.msra.mxu0 0.0
      %573 = vmatprep.subr.mxu0 0.0
      %574 = vmatpush1.msra.mxu0 0.0
      %575 = vmatprep.subr.mxu0 0.0
      %576 = vmatpush1.msra.mxu0 0.0
      %577 = vmatprep.subr.mxu0 0.0
      %578 = vmatpush1.msra.mxu0 0.0
      %579 = vmatprep.subr.mxu0 0.0
      %580 = vmatpush1.msra.mxu0 0.0
      %581 = vmatprep.mubr.f32.mxu0 0.0
      %582 = vmatmul.mubr.f32.gmra.mrb[0].mxu0 %v506
      %v583 = vpop.f32.mrb[0].mxu0
      %v584 = vadd.f32 %v487, %v583
      %v585 = vpop.f32.mrb[0].mxu0
      %586 = vmatprep.mubr.f32.mxu0 0.0
      %587 = vmatmul.mubr.f32.gmra.mrb[0].mxu0 %v509
      %v588 = vpop.f32.mrb[0].mxu0
      %v589 = vadd.f32 %v492, %v588
      %v590 = vpop.f32.mrb[0].mxu0
      %591 = vmatprep.mubr.f32.mxu0 0.0
      %592 = vmatmul.mubr.f32.gmra.mrb[0].mxu0 %v512
      %v593 = vpop.f32.mrb[0].mxu0
      %v594 = vadd.f32 %v497, %v593
      %v595 = vpop.f32.mrb[0].mxu0
      %596 = vmatprep.mubr.f32.mxu0 0.0
      %597 = vmatmul.mubr.f32.gmra.mrb[0].mxu0 %v515
      %v598 = vpop.f32.mrb[0].mxu0
      %v599 = vadd.f32 %v502, %v598
      %v600 = vpop.f32.mrb[0].mxu0
      %601 = vdwg.mxu0
      %v602 = vmax.f32 %v584, 0.0
      %v603 = vmax.f32 %v589, 0.0
      %v604 = vmax.f32 %v594, 0.0
      %v605 = vmax.f32 %v599, 0.0
      %v606 = vadd.f32 %v602, %v472
      %v607 = vadd.f32 %v603, %v473
      %v608 = vadd.f32 %v604, %v474
      %v609 = vadd.f32 %v605, %v475
      %610 = vxpose.xlu0.b32.start [1/16] %v606, 128
      %611 = vxpose.xlu0.b32.cont [2/16] %v607, 128
      %612 = vxpose.xlu0.b32.cont [3/16] %v608, 128
      %613 = vxpose.xlu0.b32.cont [4/16] %v609, 128
      %614 = vxpose.xlu0.b32.cont [5/16] 0.0, 128
      %615 = vxpose.xlu0.b32.cont [6/16] 0.0, 128
      %616 = vxpose.xlu0.b32.cont [7/16] 0.0, 128
      %617 = vxpose.xlu0.b32.cont [8/16] 0.0, 128
      %618 = vxpose.xlu0.b32.cont [9/16] 0.0, 128
      %619 = vxpose.xlu0.b32.cont [10/16] 0.0, 128
      %620 = vxpose.xlu0.b32.cont [11/16] 0.0, 128
      %621 = vxpose.xlu0.b32.cont [12/16] 0.0, 128
      %622 = vxpose.xlu0.b32.cont [13/16] 0.0, 128
      %623 = vxpose.xlu0.b32.cont [14/16] 0.0, 128
      %624 = vxpose.xlu0.b32.cont [15/16] 0.0, 128
      %625 = vxpose.xlu0.b32.end [16/16] 0.0, 128
      %v626 = vpop.trf.xlu0
      %v627 = vpop.trf.xlu0
      %v628 = vpop.trf.xlu0
      %v629 = vpop.trf.xlu0
      %v630 = vpop.trf.xlu0
      %v631 = vpop.trf.xlu0
      %v632 = vpop.trf.xlu0
      %v633 = vpop.trf.xlu0
      %v634 = vpop.trf.xlu0
      %v635 = vpop.trf.xlu0
      %v636 = vpop.trf.xlu0
      %v637 = vpop.trf.xlu0
      %v638 = vpop.trf.xlu0
      %v639 = vpop.trf.xlu0
      %v640 = vpop.trf.xlu0
      %v641 = vpop.trf.xlu0
      %v642 = vld [vmem:[%s5] sm:$0xff]
      %v643 = vld [vmem:[%s5 + $0x8] sm:$0xff]
      %v644 = vld [vmem:[%s6] sm:$0x1]
      %v646 = vlaneseq
      %v647 = vshrl.u32 %v646, 7
      %v648 = vsub.s32 0, %v647
      %v649 = vrot.slane %v644, %v648
      %v652 = vsel %vm504, %v626, 0
      %v655 = vsel %vm504, %v627, 0
      %v658 = vsel %vm504, %v628, 0
      %v661 = vsel %vm504, %v629, 0
      %v664 = vsel %vm504, %v630, 0
      %v667 = vsel %vm504, %v631, 0
      %v670 = vsel %vm504, %v632, 0
      %v673 = vsel %vm504, %v633, 0
      %v676 = vsel %vm504, %v634, 0
      %v679 = vsel %vm504, %v635, 0
      %v682 = vsel %vm504, %v636, 0
      %v685 = vsel %vm504, %v637, 0
      %v688 = vsel %vm504, %v638, 0
      %v691 = vsel %vm504, %v639, 0
      %v694 = vsel %vm504, %v640, 0
      %v697 = vsel %vm504, %v641, 0
      %v700 = vsel %vm504, %v642, 0
      %v703 = vsel %vm504, %v643, 0
      %705 = vmatprep.subr.mxu0 0.0
      %706 = vmatpush1.xpose.msra.mxu0 %v700
      %707 = vmatprep.subr.mxu0 0.0
      %708 = vmatpush1.xpose.msra.mxu0 %v703
      %709 = vmatprep.subr.mxu0 0.0
      %710 = vmatpush1.xpose.msra.mxu0 0.0
      %711 = vmatprep.subr.mxu0 0.0
      %712 = vmatpush1.xpose.msra.mxu0 0.0
      %713 = vmatprep.subr.mxu0 0.0
      %714 = vmatpush1.xpose.msra.mxu0 0.0
      %715 = vmatprep.subr.mxu0 0.0
      %716 = vmatpush1.xpose.msra.mxu0 0.0
      %717 = vmatprep.subr.mxu0 0.0
      %718 = vmatpush1.xpose.msra.mxu0 0.0
      %719 = vmatprep.subr.mxu0 0.0
      %720 = vmatpush1.xpose.msra.mxu0 0.0
      %721 = vmatprep.subr.mxu0 0.0
      %722 = vmatpush1.xpose.msra.mxu0 0.0
      %723 = vmatprep.subr.mxu0 0.0
      %724 = vmatpush1.xpose.msra.mxu0 0.0
      %725 = vmatprep.subr.mxu0 0.0
      %726 = vmatpush1.xpose.msra.mxu0 0.0
      %727 = vmatprep.subr.mxu0 0.0
      %728 = vmatpush1.xpose.msra.mxu0 0.0
      %729 = vmatprep.subr.mxu0 0.0
      %730 = vmatpush1.xpose.msra.mxu0 0.0
      %731 = vmatprep.subr.mxu0 0.0
      %732 = vmatpush1.xpose.msra.mxu0 0.0
      %733 = vmatprep.subr.mxu0 0.0
      %734 = vmatpush1.xpose.msra.mxu0 0.0
      %735 = vmatprep.subr.mxu0 0.0
      %736 = vmatpush1.xpose.msra.mxu0 0.0
      %737 = vmatprep.subr.mxu0 0.0
      %738 = vmatpush1.xpose.msra.mxu0 0.0
      %739 = vmatprep.subr.mxu0 0.0
      %740 = vmatpush1.xpose.msra.mxu0 0.0
      %741 = vmatprep.subr.mxu0 0.0
      %742 = vmatpush1.xpose.msra.mxu0 0.0
      %743 = vmatprep.subr.mxu0 0.0
      %744 = vmatpush1.xpose.msra.mxu0 0.0
      %745 = vmatprep.subr.mxu0 0.0
      %746 = vmatpush1.xpose.msra.mxu0 0.0
      %747 = vmatprep.subr.mxu0 0.0
      %748 = vmatpush1.xpose.msra.mxu0 0.0
      %749 = vmatprep.subr.mxu0 0.0
      %750 = vmatpush1.xpose.msra.mxu0 0.0
      %751 = vmatprep.subr.mxu0 0.0
      %752 = vmatpush1.xpose.msra.mxu0 0.0
      %753 = vmatprep.subr.mxu0 0.0
      %754 = vmatpush1.xpose.msra.mxu0 0.0
      %755 = vmatprep.subr.mxu0 0.0
      %756 = vmatpush1.xpose.msra.mxu0 0.0
      %757 = vmatprep.subr.mxu0 0.0
      %758 = vmatpush1.xpose.msra.mxu0 0.0
      %759 = vmatprep.subr.mxu0 0.0
      %760 = vmatpush1.xpose.msra.mxu0 0.0
      %761 = vmatprep.subr.mxu0 0.0
      %762 = vmatpush1.xpose.msra.mxu0 0.0
      %763 = vmatprep.subr.mxu0 0.0
      %764 = vmatpush1.xpose.msra.mxu0 0.0
      %765 = vmatprep.subr.mxu0 0.0
      %766 = vmatpush1.xpose.msra.mxu0 0.0
      %767 = vmatprep.subr.mxu0 0.0
      %768 = vmatpush1.xpose.msra.mxu0 0.0
      %769 = vmatprep.mubr.f32.mxu0 0.0
      %770 = vmatmul.mubr.f32.gmra.mrb[0].mxu0 %v652
      %v771 = vpop.f32.mrb[0].mxu0
      %v772 = vadd.f32 %v649, %v771
      %v773 = vpop.f32.mrb[0].mxu0
      %774 = vmatprep.mubr.f32.mxu0 0.0
      %775 = vmatmul.mubr.f32.gmra.mrb[0].mxu0 %v655
      %v776 = vpop.f32.mrb[0].mxu0
      %v777 = vadd.f32 %v649, %v776
      %v778 = vpop.f32.mrb[0].mxu0
      %779 = vmatprep.mubr.f32.mxu0 0.0
      %780 = vmatmul.mubr.f32.gmra.mrb[0].mxu0 %v658
      %v781 = vpop.f32.mrb[0].mxu0
      %v782 = vadd.f32 %v649, %v781
      %v783 = vpop.f32.mrb[0].mxu0
      %784 = vmatprep.mubr.f32.mxu0 0.0
      %785 = vmatmul.mubr.f32.gmra.mrb[0].mxu0 %v661
      %v786 = vpop.f32.mrb[0].mxu0
      %v787 = vadd.f32 %v649, %v786
      %v788 = vpop.f32.mrb[0].mxu0
      %789 = vmatprep.mubr.f32.mxu0 0.0
      %790 = vmatmul.mubr.f32.gmra.mrb[0].mxu0 %v664
      %v791 = vpop.f32.mrb[0].mxu0
      %v792 = vadd.f32 %v649, %v791
      %v793 = vpop.f32.mrb[0].mxu0
      %794 = vmatprep.mubr.f32.mxu0 0.0
      %795 = vmatmul.mubr.f32.gmra.mrb[0].mxu0 %v667
      %v796 = vpop.f32.mrb[0].mxu0
      %v797 = vadd.f32 %v649, %v796
      %v798 = vpop.f32.mrb[0].mxu0
      %799 = vmatprep.mubr.f32.mxu0 0.0
      %800 = vmatmul.mubr.f32.gmra.mrb[0].mxu0 %v670
      %v801 = vpop.f32.mrb[0].mxu0
      %v802 = vadd.f32 %v649, %v801
      %v803 = vpop.f32.mrb[0].mxu0
      %804 = vmatprep.mubr.f32.mxu0 0.0
      %805 = vmatmul.mubr.f32.gmra.mrb[0].mxu0 %v673
      %v806 = vpop.f32.mrb[0].mxu0
      %v807 = vadd.f32 %v649, %v806
      %v808 = vpop.f32.mrb[0].mxu0
      %809 = vmatprep.mubr.f32.mxu0 0.0
      %810 = vmatmul.mubr.f32.gmra.mrb[0].mxu0 %v676
      %v811 = vpop.f32.mrb[0].mxu0
      %v812 = vadd.f32 %v649, %v811
      %v813 = vpop.f32.mrb[0].mxu0
      %814 = vmatprep.mubr.f32.mxu0 0.0
      %815 = vmatmul.mubr.f32.gmra.mrb[0].mxu0 %v679
      %v816 = vpop.f32.mrb[0].mxu0
      %v817 = vadd.f32 %v649, %v816
      %v818 = vpop.f32.mrb[0].mxu0
      %819 = vmatprep.mubr.f32.mxu0 0.0
      %820 = vmatmul.mubr.f32.gmra.mrb[0].mxu0 %v682
      %v821 = vpop.f32.mrb[0].mxu0
      %v822 = vadd.f32 %v649, %v821
      %v823 = vpop.f32.mrb[0].mxu0
      %824 = vmatprep.mubr.f32.mxu0 0.0
      %825 = vmatmul.mubr.f32.gmra.mrb[0].mxu0 %v685
      %v826 = vpop.f32.mrb[0].mxu0
      %v827 = vadd.f32 %v649, %v826
      %v828 = vpop.f32.mrb[0].mxu0
      %829 = vmatprep.mubr.f32.mxu0 0.0
      %830 = vmatmul.mubr.f32.gmra.mrb[0].mxu0 %v688
      %v831 = vpop.f32.mrb[0].mxu0
      %v832 = vadd.f32 %v649, %v831
      %v833 = vpop.f32.mrb[0].mxu0
      %834 = vmatprep.mubr.f32.mxu0 0.0
      %835 = vmatmul.mubr.f32.gmra.mrb[0].mxu0 %v691
      %v836 = vpop.f32.mrb[0].mxu0
      %v837 = vadd.f32 %v649, %v836
      %v838 = vpop.f32.mrb[0].mxu0
      %839 = vmatprep.mubr.f32.mxu0 0.0
      %840 = vmatmul.mubr.f32.gmra.mrb[0].mxu0 %v694
      %v841 = vpop.f32.mrb[0].mxu0
      %v842 = vadd.f32 %v649, %v841
      %v843 = vpop.f32.mrb[0].mxu0
      %844 = vmatprep.mubr.f32.mxu0 0.0
      %845 = vmatmul.mubr.f32.gmra.mrb[0].mxu0 %v697
      %v846 = vpop.f32.mrb[0].mxu0
      %v847 = vadd.f32 %v649, %v846
      %v848 = vpop.f32.mrb[0].mxu0
      %849 = vdwg.mxu0
      %vm850 = vcmask 130048
      %851 = vst.msk [vmem:[%s280] sm:$0xff] %vm850, %v772
      %852 = vst.msk [vmem:[%s280 + $0x8] sm:$0xff] %vm850, %v777
      %853 = vst.msk [vmem:[%s280 + $0x10] sm:$0xff] %vm850, %v782
      %854 = vst.msk [vmem:[%s280 + $0x18] sm:$0xff] %vm850, %v787
      %855 = vst.msk [vmem:[%s280 + $0x20] sm:$0xff] %vm850, %v792
      %856 = vst.msk [vmem:[%s280 + $0x28] sm:$0xff] %vm850, %v797
      %857 = vst.msk [vmem:[%s280 + $0x30] sm:$0xff] %vm850, %v802
      %858 = vst.msk [vmem:[%s280 + $0x38] sm:$0xff] %vm850, %v807
      %859 = vst.msk [vmem:[%s280 + $0x40] sm:$0xff] %vm850, %v812
      %860 = vst.msk [vmem:[%s280 + $0x48] sm:$0xff] %vm850, %v817
      %861 = vst.msk [vmem:[%s280 + $0x50] sm:$0xff] %vm850, %v822
      %862 = vst.msk [vmem:[%s280 + $0x58] sm:$0xff] %vm850, %v827
      %863 = vst.msk [vmem:[%s280 + $0x60] sm:$0xff] %vm850, %v832
      %864 = vst.msk [vmem:[%s280 + $0x68] sm:$0xff] %vm850, %v837
      %865 = vst.msk [vmem:[%s280 + $0x70] sm:$0xff] %vm850, %v842
      %866 = vst.msk [vmem:[%s280 + $0x78] sm:$0xff] %vm850, %v847
      %s867 = smul.u32 16, %s18
      %p868 = scmp.lt.s32.totalorder %s867, 31
      %s869 = scalar_select %p868, %s867, 31
      %s870 = smul.addr %s869, 8
      %s871 = scalar_lea.vmem %s7, %s870
      // Predicated region
      $region49: #{coordinate_embedding.1} parent=47 // pred_check
        %p872 = pneg %p188
      $region50: #{coordinate_embedding.1} parent=47 // pred_check_branch
        %874 = sbr.rel (%p872) target = $region52
      $region51: #{coordinate_embedding.1} parent=47 // pred_region
        %s875 = smul.u32 16, %s18
      $region52: #{coordinate_embedding.1} parent=47 // pred_fallthru
        _
    $region48: #{coordinate_embedding.1} parent=5 // pred_fallthru
      _
    %p876 = scmp.le.s32.totalorder 2, %s13
    // Predicated region
    $region53: #{coordinate_embedding.1} parent=5 // pred_check
      %p877 = pneg %p876
    $region54: #{coordinate_embedding.1} parent=5 // pred_check_branch
      %879 = sbr.rel (%p877) target = $region56
    $region55: #{coordinate_embedding.1} parent=5 // pred_region
      %s880 = ssub.s32 %s13, 2
      // Predicated region
      $region57: #{coordinate_embedding.1} parent=55 // pred_check
        %p881 = pneg %p194
      $region58: #{coordinate_embedding.1} parent=55 // pred_check_branch
        %883 = sbr.rel (%p881) target = $region60
      $region59: #{coordinate_embedding.1} parent=55 // pred_region
        %s884 = smul.u32 16, %s19
        %p885 = scmp.lt.s32.totalorder %s884, 31
        %s886 = scalar_select %p885, %s884, 31
        %s887 = smul.addr %s886, 8
        %s888 = scalar_lea.vmem %s7, %s887
      $region60: #{coordinate_embedding.1} parent=55 // pred_fallthru
        _
    $region56: #{coordinate_embedding.1} parent=5 // pred_fallthru
      _
  $region6: #{coordinate_embedding.1} parent=0 // loop_footer
    %s17 = sadd.s32 1, %s13
  $region7: #{coordinate_embedding.1} parent=0 // loop_footer_branch
    %12 = sbr.rel target = $region3
  $region8: #{coordinate_embedding.1} parent=0 // loop_exit
    _

</llo_original>
